<compile_context>
chip_gen: v6e
topology: v6e:2x2x1
jax: 0.10.0
libtpu: 0.0.40
codegen_flags: <defaults>
</compile_context>

<pallas_src>
import functools

import jax
import jax.numpy as jnp
from jax.experimental import pallas as pl
from jax.experimental.pallas import tpu as pltpu


def _round_up(x, m):
    return ((x + m - 1) // m) * m


def head_loss_kernel(h_ref, w1_ref, b1_ref, w2_ref, b2_ref, lab_ref, part_ref,
                     *, n_tokens):
    # h_ref:  (TN, E)  f32/bf16   w1_ref: (E, H)  bf16   b1_ref: (1, H)  f32
    # w2_ref: (H, Cp)  bf16       b2_ref: (1, Cp) f32 (padded lanes = -1e30)
    # lab_ref:(TN, 1)  int32      part_ref: (1, 1, 128) f32 [lane0=sum, lane1=count]
    tn = h_ref.shape[0]

    # Cast the streamed hidden tile to bf16 in-kernel (VPU) so the first matmul
    # runs at bf16 MXU throughput; accumulation stays f32.
    h = h_ref[...].astype(jnp.bfloat16)

    # Linear(E, H) -> Tanh (f32).
    z1 = jnp.tanh(
        jnp.dot(h, w1_ref[...], preferred_element_type=jnp.float32) + b1_ref[...]
    )

    # Linear(H, Cp): bf16 x bf16 on the MXU, f32 accumulation + f32 bias.
    logits = (
        jnp.dot(z1.astype(jnp.bfloat16), w2_ref[...],
                preferred_element_type=jnp.float32)
        + b2_ref[...]
    )                                                                   # (TN, Cp)

    # log-softmax over the class dim (padded lanes carry -1e30 -> exp == 0).
    m = jnp.max(logits, axis=-1, keepdims=True)
    lse = jnp.log(jnp.sum(jnp.exp(logits - m), axis=-1, keepdims=True)) + m  # (TN,1)

    labels = lab_ref[...]                                               # (TN, 1)
    cls_iota = jax.lax.broadcasted_iota(jnp.int32, logits.shape, 1)     # (TN, Cp)
    picked = jnp.sum(
        jnp.where(cls_iota == labels, logits, 0.0), axis=-1, keepdims=True
    )                                                                   # (TN, 1)

    # Valid = real token row (ragged last tile) AND label != ignore_index.
    row = jax.lax.broadcasted_iota(jnp.int32, (tn, 1), 0) + pl.program_id(0) * tn
    valid = jnp.logical_and(row < n_tokens, labels != -100)

    # Select (not multiply): rows past n_tokens hold uninitialized pad data
    # whose lse may be non-finite; where() keeps them out of the sum.
    nll = jnp.where(valid, lse - picked, 0.0)

    loss_sum = jnp.sum(nll)
    count = jnp.sum(valid.astype(jnp.float32))

    lane = jax.lax.broadcasted_iota(jnp.int32, part_ref.shape, 2)       # (1,1,128)
    part_ref[...] = (
        jnp.where(lane == 0, loss_sum, 0.0) + jnp.where(lane == 1, count, 0.0)
    )


@functools.partial(jax.jit, static_argnames=("tile_n",))
def model_head_loss(last_hidden_state, labels, w1, b1, w2, b2, *, tile_n=1024):
    """last_hidden_state: (B, S, E) float; labels: (B, S) int32 (-100 = ignore)."""
    B, S, E = last_hidden_state.shape
    H = w1.shape[1]
    C = w2.shape[1]
    N = B * S

    # ---- token tile selection --------------------------------------------
    # Multiple of 256 (v6e/v7x 256x256 MXU; also satisfies the (8,128) rule and
    # v5e's 128x128 MXU) unless N is small; shrink so the 1-D grid has >= 2
    # steps whenever possible so both v7x TensorCores get work.
    TN = min(_round_up(tile_n, 256), _round_up(N, 8))
    if N > 8 and pl.cdiv(N, TN) < 2:
        TN = max(8, _round_up(pl.cdiv(N, 2), 8))
    num_tiles = pl.cdiv(N, TN)

    # Lane-dense class dim: padded bias lanes get -1e30 so they never influence
    # max / softmax / picked-logit.
    Cp = _round_up(C, 128)

    # No wrapper-side cast/pad HBM pass: stream the encoder output as-is (the
    # kernel casts to bf16 after load); the ragged last tile is masked in-kernel.
    h_flat = last_hidden_state.reshape(N, E)
    lab_flat = labels.reshape(N, 1).astype(jnp.int32)

    # Tiny resident weights: bf16 for both MXU operands, f32 biases.
    w1_b = w1.astype(jnp.bfloat16)                                      # (E, H)
    b1_2d = b1.astype(jnp.float32).reshape(1, H)
    w2_b = jnp.pad(w2.astype(jnp.bfloat16), ((0, 0), (0, Cp - C)))      # (H, Cp)
    b2_p = jnp.pad(b2.astype(jnp.float32), (0, Cp - C),
                   constant_values=-1e30).reshape(1, Cp)

    # ---- VMEM budget (derived, not hard-coded) -----------------------------
    h_item = jnp.dtype(last_hidden_state.dtype).itemsize
    vmem_est = (
        2 * TN * E * h_item            # streamed hidden tile, double-buffered
        + 2 * TN * 128 * 4             # labels tile (lane-padded), double-buffered
        + E * H * 2 + H * Cp * 2       # resident bf16 weights (single-buffered)
        + 8 * (H + Cp) * 4             # biases (sublane-padded)
        + TN * (H + 3 * Cp) * 4        # z1 / logits / exp temporaries (f32)
        + 2 * 128 * 4                  # partial-output block
    )
    # >= 32 MiB so v5e/v6e aren't under-fed; <= 48 MiB so v7x (64 MiB) is safe.
    vmem_limit = int(min(max(2 * vmem_est, 32 * 1024 * 1024), 48 * 1024 * 1024))

    # Constant-index operands: single-buffer (double-buffering them is pure
    # VMEM waste).
    resident = dict(pipeline_mode=pl.Buffered(1))

    partials = pl.pallas_call(
        functools.partial(head_loss_kernel, n_tokens=N),
        out_shape=jax.ShapeDtypeStruct((num_tiles, 1, 128), jnp.float32),
        grid=(num_tiles,),
        in_specs=[
            pl.BlockSpec((TN, E), lambda i: (i, 0)),               # hidden (streamed)
            pl.BlockSpec((E, H), lambda i: (0, 0), **resident),    # w1 (resident)
            pl.BlockSpec((1, H), lambda i: (0, 0), **resident),    # b1
            pl.BlockSpec((H, Cp), lambda i: (0, 0), **resident),   # w2 (padded)
            pl.BlockSpec((1, Cp), lambda i: (0, 0), **resident),   # b2 (padded)
            pl.BlockSpec((TN, 1), lambda i: (i, 0)),               # labels (streamed)
        ],
        out_specs=pl.BlockSpec((1, 1, 128), lambda i: (i, 0, 0)),
        compiler_params=pltpu.CompilerParams(
            dimension_semantics=("parallel",),
            vmem_limit_bytes=vmem_limit,
        ),
    )(h_flat, w1_b, b1_2d, w2_b, b2_p, lab_flat)

    loss_sum = jnp.sum(partials[:, 0, 0])
    count = jnp.sum(partials[:, 0, 1])
    # Note: count == 0 (all labels ignored) yields NaN, matching PyTorch's
    # CrossEntropyLoss mean-reduction semantics with ignore_index.
    return loss_sum / count


def reference_head_loss(last_hidden_state, labels, w1, b1, w2, b2):
    """Pure-JAX f32 reference matching the PyTorch module (eval-mode dropout)."""
    B, S, E = last_hidden_state.shape
    h = last_hidden_state.reshape(B * S, E).astype(jnp.float32)
    z1 = jnp.tanh(h @ w1.astype(jnp.float32) + b1.astype(jnp.float32))
    logits = z1 @ w2.astype(jnp.float32) + b2.astype(jnp.float32)
    logp = jax.nn.log_softmax(logits, axis=-1)
    lab = labels.reshape(-1)
    valid = lab != -100
    safe_lab = jnp.where(valid, lab, 0)
    nll = -jnp.take_along_axis(logp, safe_lab[:, None], axis=-1)[:, 0]
    return jnp.sum(jnp.where(valid, nll, 0.0)) / jnp.sum(valid.astype(jnp.float32))


if __name__ == "__main__":
    # Small shapes consistent with the module's forward:
    # batch=2, seq=8, embedding_dim=32, hidden_size=32, class_num=8
    B, S, E, H, C = 2, 8, 32, 32, 8

    key = jax.random.PRNGKey(0)
    k_h, k_w1, k_b1, k_w2, k_b2, k_lab, k_ign = jax.random.split(key, 7)

    last_hidden_state = jax.random.normal(k_h, (B, S, E), dtype=jnp.float32)

    # nn.Linear-like uniform init; weights stored (in, out) so kernel does x @ W + b.
    w1 = jax.random.uniform(k_w1, (E, H), jnp.float32, -1.0 / (E ** 0.5), 1.0 / (E ** 0.5))
    b1 = jax.random.uniform(k_b1, (H,), jnp.float32, -1.0 / (E ** 0.5), 1.0 / (E ** 0.5))
    w2 = jax.random.uniform(k_w2, (H, C), jnp.float32, -1.0 / (H ** 0.5), 1.0 / (H ** 0.5))
    b2 = jax.random.uniform(k_b2, (C,), jnp.float32, -1.0 / (H ** 0.5), 1.0 / (H ** 0.5))

    labels = jax.random.randint(k_lab, (B, S), 0, C, dtype=jnp.int32)
    ignore_mask = jax.random.bernoulli(k_ign, 0.25, (B, S))
    labels = jnp.where(ignore_mask, jnp.int32(-100), labels)

    loss = model_head_loss(last_hidden_state, labels, w1, b1, w2, b2)
    jax.block_until_ready(loss)

    # Validate against the true f32 (PyTorch-equivalent) numerics; tolerance
    # covers the kernel's bf16 MXU inputs (f32 accumulation).
    ref = reference_head_loss(last_hidden_state, labels, w1, b1, w2, b2)
    assert jnp.isfinite(loss), loss
    assert jnp.allclose(loss, ref, rtol=2e-2, atol=2e-2), (loss, ref)

    print("KERNEL_OK")
</pallas_src>

<mosaic_0001>
module attributes {stable_mosaic.version = 11 : i64} {
  func.func @head_loss_kernel(%arg0: i32, %arg1: memref<8x32xf32, #tpu.memory_space<vmem>>, %arg2: memref<32x32xbf16, #tpu.memory_space<vmem>>, %arg3: memref<1x32xf32, #tpu.memory_space<vmem>>, %arg4: memref<32x128xbf16, #tpu.memory_space<vmem>>, %arg5: memref<1x128xf32, #tpu.memory_space<vmem>>, %arg6: memref<8x1xi32, #tpu.memory_space<vmem>>, %arg7: memref<1x1x128xf32, #tpu.memory_space<vmem>>) attributes {dimension_semantics = [#tpu.dimension_semantics<parallel>], iteration_bounds = array<i64: 2>, scalar_prefetch = 0 : i64, scratch_operands = 0 : i64, tpu.core_type = #tpu.core_type<tc>, window_params = [{transform_indices = @transform_0, window_bounds = array<i64: 8, 32>}, {pipeline_mode = #tpu.pipeline_mode<synchronous>, transform_indices = @transform_1, window_bounds = array<i64: 32, 32>}, {pipeline_mode = #tpu.pipeline_mode<synchronous>, transform_indices = @transform_2, window_bounds = array<i64: 1, 32>}, {pipeline_mode = #tpu.pipeline_mode<synchronous>, transform_indices = @transform_3, window_bounds = array<i64: 32, 128>}, {pipeline_mode = #tpu.pipeline_mode<synchronous>, transform_indices = @transform_4, window_bounds = array<i64: 1, 128>}, {transform_indices = @transform_5, window_bounds = array<i64: 8, 1>}, {transform_indices = @transform_6, window_bounds = array<i64: 1, 1, 128>}]} {
    %c0 = arith.constant 0 : index
    %c0_0 = arith.constant 0 : index
    %0 = vector.load %arg1[%c0, %c0_0] : memref<8x32xf32, #tpu.memory_space<vmem>>, vector<8x32xf32>
    %1 = arith.truncf %0 : vector<8x32xf32> to vector<8x32xbf16>
    %c0_1 = arith.constant 0 : index
    %c0_2 = arith.constant 0 : index
    %2 = vector.load %arg2[%c0_1, %c0_2] : memref<32x32xbf16, #tpu.memory_space<vmem>>, vector<32x32xbf16>
    %cst = arith.constant dense<0.000000e+00> : vector<8x32xf32>
    %3 = tpu.matmul %1, %2, %cst {dimension_numbers = #tpu.dot_dimension_numbers<[1], [0], [0], [1], [0, 0, 1, 1], [], []>} : vector<8x32xbf16>, vector<32x32xbf16>, vector<8x32xf32> -> vector<8x32xf32>
    %c0_3 = arith.constant 0 : index
    %c0_4 = arith.constant 0 : index
    %4 = vector.load %arg3[%c0_3, %c0_4] : memref<1x32xf32, #tpu.memory_space<vmem>>, vector<1x32xf32>
    %5 = vector.broadcast %4 : vector<1x32xf32> to vector<8x32xf32>
    %6 = arith.addf %3, %5 : vector<8x32xf32>
    %7 = math.tanh %6 : vector<8x32xf32>
    %8 = arith.truncf %7 : vector<8x32xf32> to vector<8x32xbf16>
    %c0_5 = arith.constant 0 : index
    %c0_6 = arith.constant 0 : index
    %9 = vector.load %arg4[%c0_5, %c0_6] : memref<32x128xbf16, #tpu.memory_space<vmem>>, vector<32x128xbf16>
    %cst_7 = arith.constant dense<0.000000e+00> : vector<8x128xf32>
    %10 = tpu.matmul %8, %9, %cst_7 {dimension_numbers = #tpu.dot_dimension_numbers<[1], [0], [0], [1], [0, 0, 1, 1], [], []>} : vector<8x32xbf16>, vector<32x128xbf16>, vector<8x128xf32> -> vector<8x128xf32>
    %c0_8 = arith.constant 0 : index
    %c0_9 = arith.constant 0 : index
    %11 = vector.load %arg5[%c0_8, %c0_9] : memref<1x128xf32, #tpu.memory_space<vmem>>, vector<1x128xf32>
    %12 = vector.broadcast %11 : vector<1x128xf32> to vector<8x128xf32>
    %13 = arith.addf %10, %12 : vector<8x128xf32>
    %cst_10 = arith.constant dense<0xFF800000> : vector<8xf32>
    %14 = vector.multi_reduction <maximumf>, %13, %cst_10 [1] : vector<8x128xf32> to vector<8xf32>
    %15 = vector.shape_cast %14 : vector<8xf32> to vector<8x1xf32>
    %16 = vector.broadcast %15 : vector<8x1xf32> to vector<8x128xf32>
    %17 = arith.subf %13, %16 : vector<8x128xf32>
    %18 = math.exp %17 : vector<8x128xf32>
    %cst_11 = arith.constant dense<0.000000e+00> : vector<8xf32>
    %19 = vector.multi_reduction <add>, %18, %cst_11 [1] : vector<8x128xf32> to vector<8xf32>
    %20 = vector.shape_cast %19 : vector<8xf32> to vector<8x1xf32>
    %21 = math.log %20 : vector<8x1xf32>
    %22 = arith.addf %21, %15 : vector<8x1xf32>
    %c0_12 = arith.constant 0 : index
    %c0_13 = arith.constant 0 : index
    %23 = vector.load %arg6[%c0_12, %c0_13] : memref<8x1xi32, #tpu.memory_space<vmem>>, vector<8x1xi32>
    %24 = tpu.iota {dimensions = array<i32: 1>} : vector<8x128xi32>
    %25 = vector.broadcast %23 : vector<8x1xi32> to vector<8x128xi32>
    %26 = arith.cmpi eq, %24, %25 : vector<8x128xi32>
    %cst_14 = arith.constant 0.000000e+00 : f32
    %27 = vector.broadcast %cst_14 : f32 to vector<8x128xf32>
    %28 = arith.select %26, %13, %27 : vector<8x128xi1>, vector<8x128xf32>
    %cst_15 = arith.constant dense<0.000000e+00> : vector<8xf32>
    %29 = vector.multi_reduction <add>, %28, %cst_15 [1] : vector<8x128xf32> to vector<8xf32>
    %30 = vector.shape_cast %29 : vector<8xf32> to vector<8x1xf32>
    %31 = tpu.iota {dimensions = array<i32: 0>} : vector<8x1xi32>
    %c8_i32 = arith.constant 8 : i32
    %32 = arith.muli %arg0, %c8_i32 : i32
    %33 = vector.broadcast %32 : i32 to vector<8x1xi32>
    %34 = arith.addi %31, %33 : vector<8x1xi32>
    %c16_i32 = arith.constant 16 : i32
    %35 = vector.broadcast %c16_i32 : i32 to vector<8x1xi32>
    %36 = arith.cmpi slt, %34, %35 : vector<8x1xi32>
    %c-100_i32 = arith.constant -100 : i32
    %37 = vector.broadcast %c-100_i32 : i32 to vector<8x1xi32>
    %38 = arith.cmpi ne, %23, %37 : vector<8x1xi32>
    %39 = arith.andi %36, %38 : vector<8x1xi1>
    %40 = arith.subf %22, %30 : vector<8x1xf32>
    %cst_16 = arith.constant 0.000000e+00 : f32
    %41 = vector.broadcast %cst_16 : f32 to vector<8x1xf32>
    %42 = arith.select %39, %40, %41 : vector<8x1xi1>, vector<8x1xf32>
    %43 = vector.shape_cast %42 : vector<8x1xf32> to vector<1x8x1xf32>
    %cst_17 = arith.constant dense<0.000000e+00> : vector<1xf32>
    %44 = vector.multi_reduction <add>, %43, %cst_17 [1, 2] : vector<1x8x1xf32> to vector<1xf32>
    %45 = vector.shape_cast %44 : vector<1xf32> to vector<1x1x1xf32>
    %46 = vector.extract %45[0, 0, 0] : f32 from vector<1x1x1xf32>
    %47 = arith.extui %39 : vector<8x1xi1> to vector<8x1xi32>
    %48 = arith.sitofp %47 : vector<8x1xi32> to vector<8x1xf32>
    %49 = vector.shape_cast %48 : vector<8x1xf32> to vector<1x8x1xf32>
    %cst_18 = arith.constant dense<0.000000e+00> : vector<1xf32>
    %50 = vector.multi_reduction <add>, %49, %cst_18 [1, 2] : vector<1x8x1xf32> to vector<1xf32>
    %51 = vector.shape_cast %50 : vector<1xf32> to vector<1x1x1xf32>
    %52 = vector.extract %51[0, 0, 0] : f32 from vector<1x1x1xf32>
    %53 = tpu.iota {dimensions = array<i32: 2>} : vector<1x1x128xi32>
    %c0_i32 = arith.constant 0 : i32
    %54 = vector.broadcast %c0_i32 : i32 to vector<1x1x128xi32>
    %55 = arith.cmpi eq, %53, %54 : vector<1x1x128xi32>
    %cst_19 = arith.constant 0.000000e+00 : f32
    %56 = vector.broadcast %46 : f32 to vector<1x1x128xf32>
    %57 = vector.broadcast %cst_19 : f32 to vector<1x1x128xf32>
    %58 = arith.select %55, %56, %57 : vector<1x1x128xi1>, vector<1x1x128xf32>
    %c1_i32 = arith.constant 1 : i32
    %59 = vector.broadcast %c1_i32 : i32 to vector<1x1x128xi32>
    %60 = arith.cmpi eq, %53, %59 : vector<1x1x128xi32>
    %cst_20 = arith.constant 0.000000e+00 : f32
    %61 = vector.broadcast %52 : f32 to vector<1x1x128xf32>
    %62 = vector.broadcast %cst_20 : f32 to vector<1x1x128xf32>
    %63 = arith.select %60, %61, %62 : vector<1x1x128xi1>, vector<1x1x128xf32>
    %64 = arith.addf %58, %63 : vector<1x1x128xf32>
    %c0_21 = arith.constant 0 : index
    %c0_22 = arith.constant 0 : index
    %c0_23 = arith.constant 0 : index
    %65 = vector.load %arg7[%c0_21, %c0_22, %c0_23] : memref<1x1x128xf32, #tpu.memory_space<vmem>>, vector<1x1x128xf32>
    tpu.vector_store %arg7[%c0_21, %c0_22, %c0_23], %64 {strides = array<i32>} : memref<1x1x128xf32, #tpu.memory_space<vmem>>, vector<1x1x128xf32>,
    return
  }
  func.func @transform_0(%arg0: i32) -> (i32, i32) {
    %c0_i32 = arith.constant 0 : i32
    %c0_i32_0 = arith.constant 0 : i32
    return %arg0, %c0_i32 : i32, i32
  }
  func.func @transform_1(%arg0: i32) -> (i32, i32) {
    %c0_i32 = arith.constant 0 : i32
    %c0_i32_0 = arith.constant 0 : i32
    %c0_i32_1 = arith.constant 0 : i32
    return %c0_i32, %c0_i32_0 : i32, i32
  }
  func.func @transform_2(%arg0: i32) -> (i32, i32) {
    %c0_i32 = arith.constant 0 : i32
    %c0_i32_0 = arith.constant 0 : i32
    %c0_i32_1 = arith.constant 0 : i32
    return %c0_i32, %c0_i32_0 : i32, i32
  }
  func.func @transform_3(%arg0: i32) -> (i32, i32) {
    %c0_i32 = arith.constant 0 : i32
    %c0_i32_0 = arith.constant 0 : i32
    %c0_i32_1 = arith.constant 0 : i32
    return %c0_i32, %c0_i32_0 : i32, i32
  }
  func.func @transform_4(%arg0: i32) -> (i32, i32) {
    %c0_i32 = arith.constant 0 : i32
    %c0_i32_0 = arith.constant 0 : i32
    %c0_i32_1 = arith.constant 0 : i32
    return %c0_i32, %c0_i32_0 : i32, i32
  }
  func.func @transform_5(%arg0: i32) -> (i32, i32) {
    %c0_i32 = arith.constant 0 : i32
    %c0_i32_0 = arith.constant 0 : i32
    return %arg0, %c0_i32 : i32, i32
  }
  func.func @transform_6(%arg0: i32) -> (i32, i32, i32) {
    %c0_i32 = arith.constant 0 : i32
    %c0_i32_0 = arith.constant 0 : i32
    %c0_i32_1 = arith.constant 0 : i32
    return %arg0, %c0_i32, %c0_i32_0 : i32, i32, i32
  }
}

</mosaic_0001>

<llo_original>
// kernel: model_head_loss.1
$region0: #{model_head_loss.1}
  #allocation0 [shape = 'u32[]', space=smem, size = 0x4, offset = 0x4, fixed_abs, tag = 'smem constant byte address 0x4 - core index']
  #allocation1 [shape = 'u32[144,128]{1,0:T(1,128)}', space=vmem, size = 0x12000, scoped, tag = 'internal scratch']
  %s0 = inlined_call_operand.vmem [shape: f32[16,32], index: 0, kind: input, shape index: {}]
  %s1 = inlined_call_operand.vmem [shape: bf16[32,32], index: 1, kind: input, shape index: {}]
  %s2 = inlined_call_operand.vmem [shape: f32[1,32], index: 2, kind: input, shape index: {}]
  %s3 = inlined_call_operand.vmem [shape: bf16[32,128], index: 3, kind: input, shape index: {}]
  %s4 = inlined_call_operand.vmem [shape: f32[1,128], index: 4, kind: input, shape index: {}]
  %s5 = inlined_call_operand.vmem [shape: s32[16,1], index: 5, kind: input, shape index: {}]
  %s6 = inlined_call_operand.vmem [shape: f32[2,1,128], index: 6, kind: output, shape index: {}]
  %s7 = sld [smem:[#allocation0]]
  $region57: #{model_head_loss.1} parent=0
    _
  %s9 = ssub.s32 1, %s7
  %s10 = scalar_select 0, %s9, %s7
  loop: start=0, step=1, limit=4
  $region2: #{model_head_loss.1} parent=0 // loop_pre_header
    _
  $region3: #{model_head_loss.1} parent=0 // loop_header
    %s12 = sphi 0, %s16
    %p13 = scmp.ge.s32.totalorder %s12, 4
    %s22 = sphi 0, %s24
    %s25 = sphi 0, %s22
    %s26 = sphi 0, %s25
    %s42 = sphi 0, %s26
    %s46 = sphi 0, %s46
    %s48 = sphi 0, %s46
    %s49 = sphi 0, %s48
    %s63 = sphi 0, %s49
    %s67 = sphi 0, %s67
    %s69 = sphi 0, %s67
    %s70 = sphi 0, %s69
    %s84 = sphi 0, %s70
    %s88 = sphi 0, %s88
    %s90 = sphi 0, %s88
    %s91 = sphi 0, %s90
    %s105 = sphi 0, %s91
    %s109 = sphi 0, %s109
    %s111 = sphi 0, %s109
    %s112 = sphi 0, %s111
    %s126 = sphi 0, %s112
    %s132 = sphi 0, %s134
    %s135 = sphi 0, %s132
    %s136 = sphi 0, %s135
    %s152 = sphi 0, %s136
    %s158 = sphi 0, %s160
    %s161 = sphi 0, %s158
    %s162 = sphi 0, %s161
    %s178 = sphi 0, %s162
  $region4: #{model_head_loss.1} parent=0 // loop_header_branch
    %15 = sbr.rel (%p13) target = $region8
  $region5: #{model_head_loss.1} parent=0 // loop_body
    %s17 = ssub.s32 %s12, 1
    %s18 = ssub.s32 %s12, 2
    %s19 = sadd.s32 %s12, 1
    %s20 = ssub.s32 %s12, %s19
    %p21 = scmp.eq.s32.totalorder %s20, 0
    %s23 = sadd.s32 %s22, 1
    %s24 = scalar_select %p21, %s22, %s23
    %p27 = pneg %p21
    %p28 = scmp.eq.s32.totalorder %s12, 1
    %p29 = por %p27, %p28
    %p30 = scmp.ne.s32.totalorder %s22, %s25
    %p31 = scmp.eq.s32.totalorder %s12, 0
    %p32 = por %p30, %p31
    %p33 = scmp.ne.s32.totalorder %s22, %s25
    %p34 = scmp.eq.s32.totalorder %s17, 1
    %p35 = por %p33, %p34
    %p36 = scmp.ne.s32.totalorder %s25, %s26
    %p37 = scmp.eq.s32.totalorder %s17, 0
    %p38 = por %p36, %p37
    %p39 = scmp.ne.s32.totalorder %s25, %s26
    %p40 = scmp.eq.s32.totalorder %s18, 1
    %p41 = por %p39, %p40
    %p43 = scmp.ne.s32.totalorder %s26, %s42
    %p44 = scmp.eq.s32.totalorder %s18, 0
    %p45 = por %p43, %p44
    %s47 = sadd.s32 %s46, 1
    %p50 = scmp.eq.s32.totalorder %s12, 1
    %p51 = scmp.ne.s32.totalorder %s46, %s48
    %p52 = scmp.eq.s32.totalorder %s12, 0
    %p53 = por %p51, %p52
    %p54 = scmp.ne.s32.totalorder %s46, %s48
    %p55 = scmp.eq.s32.totalorder %s17, 1
    %p56 = por %p54, %p55
    %p57 = scmp.ne.s32.totalorder %s48, %s49
    %p58 = scmp.eq.s32.totalorder %s17, 0
    %p59 = por %p57, %p58
    %p60 = scmp.ne.s32.totalorder %s48, %s49
    %p61 = scmp.eq.s32.totalorder %s18, 1
    %p62 = por %p60, %p61
    %p64 = scmp.ne.s32.totalorder %s49, %s63
    %p65 = scmp.eq.s32.totalorder %s18, 0
    %p66 = por %p64, %p65
    %s68 = sadd.s32 %s67, 1
    %p71 = scmp.eq.s32.totalorder %s12, 1
    %p72 = scmp.ne.s32.totalorder %s67, %s69
    %p73 = scmp.eq.s32.totalorder %s12, 0
    %p74 = por %p72, %p73
    %p75 = scmp.ne.s32.totalorder %s67, %s69
    %p76 = scmp.eq.s32.totalorder %s17, 1
    %p77 = por %p75, %p76
    %p78 = scmp.ne.s32.totalorder %s69, %s70
    %p79 = scmp.eq.s32.totalorder %s17, 0
    %p80 = por %p78, %p79
    %p81 = scmp.ne.s32.totalorder %s69, %s70
    %p82 = scmp.eq.s32.totalorder %s18, 1
    %p83 = por %p81, %p82
    %p85 = scmp.ne.s32.totalorder %s70, %s84
    %p86 = scmp.eq.s32.totalorder %s18, 0
    %p87 = por %p85, %p86
    %s89 = sadd.s32 %s88, 1
    %p92 = scmp.eq.s32.totalorder %s12, 1
    %p93 = scmp.ne.s32.totalorder %s88, %s90
    %p94 = scmp.eq.s32.totalorder %s12, 0
    %p95 = por %p93, %p94
    %p96 = scmp.ne.s32.totalorder %s88, %s90
    %p97 = scmp.eq.s32.totalorder %s17, 1
    %p98 = por %p96, %p97
    %p99 = scmp.ne.s32.totalorder %s90, %s91
    %p100 = scmp.eq.s32.totalorder %s17, 0
    %p101 = por %p99, %p100
    %p102 = scmp.ne.s32.totalorder %s90, %s91
    %p103 = scmp.eq.s32.totalorder %s18, 1
    %p104 = por %p102, %p103
    %p106 = scmp.ne.s32.totalorder %s91, %s105
    %p107 = scmp.eq.s32.totalorder %s18, 0
    %p108 = por %p106, %p107
    %s110 = sadd.s32 %s109, 1
    %p113 = scmp.eq.s32.totalorder %s12, 1
    %p114 = scmp.ne.s32.totalorder %s109, %s111
    %p115 = scmp.eq.s32.totalorder %s12, 0
    %p116 = por %p114, %p115
    %p117 = scmp.ne.s32.totalorder %s109, %s111
    %p118 = scmp.eq.s32.totalorder %s17, 1
    %p119 = por %p117, %p118
    %p120 = scmp.ne.s32.totalorder %s111, %s112
    %p121 = scmp.eq.s32.totalorder %s17, 0
    %p122 = por %p120, %p121
    %p123 = scmp.ne.s32.totalorder %s111, %s112
    %p124 = scmp.eq.s32.totalorder %s18, 1
    %p125 = por %p123, %p124
    %p127 = scmp.ne.s32.totalorder %s112, %s126
    %p128 = scmp.eq.s32.totalorder %s18, 0
    %p129 = por %p127, %p128
    %s130 = ssub.s32 %s12, %s19
    %p131 = scmp.eq.s32.totalorder %s130, 0
    %s133 = sadd.s32 %s132, 1
    %s134 = scalar_select %p131, %s132, %s133
    %p137 = pneg %p131
    %p138 = scmp.eq.s32.totalorder %s12, 1
    %p139 = por %p137, %p138
    %p140 = scmp.ne.s32.totalorder %s132, %s135
    %p141 = scmp.eq.s32.totalorder %s12, 0
    %p142 = por %p140, %p141
    %p143 = scmp.ne.s32.totalorder %s132, %s135
    %p144 = scmp.eq.s32.totalorder %s17, 1
    %p145 = por %p143, %p144
    %p146 = scmp.ne.s32.totalorder %s135, %s136
    %p147 = scmp.eq.s32.totalorder %s17, 0
    %p148 = por %p146, %p147
    %p149 = scmp.ne.s32.totalorder %s135, %s136
    %p150 = scmp.eq.s32.totalorder %s18, 1
    %p151 = por %p149, %p150
    %p153 = scmp.ne.s32.totalorder %s136, %s152
    %p154 = scmp.eq.s32.totalorder %s18, 0
    %p155 = por %p153, %p154
    %s156 = ssub.s32 %s12, %s19
    %p157 = scmp.eq.s32.totalorder %s156, 0
    %s159 = sadd.s32 %s158, 1
    %s160 = scalar_select %p157, %s158, %s159
    %p163 = pneg %p157
    %p164 = scmp.eq.s32.totalorder %s12, 1
    %p165 = por %p163, %p164
    %p166 = scmp.ne.s32.totalorder %s158, %s161
    %p167 = scmp.eq.s32.totalorder %s12, 0
    %p168 = por %p166, %p167
    %p169 = scmp.ne.s32.totalorder %s158, %s161
    %p170 = scmp.eq.s32.totalorder %s17, 1
    %p171 = por %p169, %p170
    %p172 = scmp.ne.s32.totalorder %s161, %s162
    %p173 = scmp.eq.s32.totalorder %s17, 0
    %p174 = por %p172, %p173
    %p175 = scmp.ne.s32.totalorder %s161, %s162
    %p176 = scmp.eq.s32.totalorder %s18, 1
    %p177 = por %p175, %p176
    %p179 = scmp.ne.s32.totalorder %s162, %s178
    %p180 = scmp.eq.s32.totalorder %s18, 0
    %p181 = por %p179, %p180
    %p182 = scmp.le.s32.totalorder 1, %s12
    %p183 = scmp.lt.s32.totalorder %s12, 3
    %p184 = pnand %p182, %p183
    %p185 = pneg %p184
    // Predicated region
    $region9: #{model_head_loss.1} parent=5 // pred_check
      _
    $region10: #{model_head_loss.1} parent=5 // pred_check_branch
      %187 = sbr.rel (%p184) target = $region12
    $region11: #{model_head_loss.1} parent=5 // pred_region
      %s188 = ssub.s32 %s12, 1
      // Predicated region
      $region13: #{model_head_loss.1} parent=11 // pred_check
        %p189 = pneg %p59
      $region14: #{model_head_loss.1} parent=11 // pred_check_branch
        %191 = sbr.rel (%p189) target = $region16
      $region15: #{model_head_loss.1} parent=11 // pred_region
        _
      $region16: #{model_head_loss.1} parent=11 // pred_fallthru
        _
      // Predicated region
      $region17: #{model_head_loss.1} parent=11 // pred_check
        %p192 = pneg %p80
      $region18: #{model_head_loss.1} parent=11 // pred_check_branch
        %194 = sbr.rel (%p192) target = $region20
      $region19: #{model_head_loss.1} parent=11 // pred_region
        _
      $region20: #{model_head_loss.1} parent=11 // pred_fallthru
        _
      // Predicated region
      $region21: #{model_head_loss.1} parent=11 // pred_check
        %p195 = pneg %p101
      $region22: #{model_head_loss.1} parent=11 // pred_check_branch
        %197 = sbr.rel (%p195) target = $region24
      $region23: #{model_head_loss.1} parent=11 // pred_region
        _
      $region24: #{model_head_loss.1} parent=11 // pred_fallthru
        _
      // Predicated region
      $region25: #{model_head_loss.1} parent=11 // pred_check
        %p198 = pneg %p122
      $region26: #{model_head_loss.1} parent=11 // pred_check_branch
        %200 = sbr.rel (%p198) target = $region28
      $region27: #{model_head_loss.1} parent=11 // pred_region
        _
      $region28: #{model_head_loss.1} parent=11 // pred_fallthru
        _
    $region12: #{model_head_loss.1} parent=5 // pred_fallthru
      _
    %p201 = scmp.lt.s32.totalorder %s12, 2
    // Predicated region
    $region29: #{model_head_loss.1} parent=5 // pred_check
      %p202 = pneg %p201
    $region30: #{model_head_loss.1} parent=5 // pred_check_branch
      %204 = sbr.rel (%p202) target = $region32
    $region31: #{model_head_loss.1} parent=5 // pred_region
      // Predicated region
      $region33: #{model_head_loss.1} parent=31 // pred_check
        %p205 = pneg %p32
      $region34: #{model_head_loss.1} parent=31 // pred_check_branch
        %207 = sbr.rel (%p205) target = $region36
      $region35: #{model_head_loss.1} parent=31 // pred_region
        %p208 = scmp.lt.s32.totalorder %s12, 1
        %s209 = scalar_select %p208, %s12, 1
        %s210 = smul.addr %s209, 8
        %s211 = scalar_lea.vmem %s0, %s210
      $region36: #{model_head_loss.1} parent=31 // pred_fallthru
        _
      // Predicated region
      $region37: #{model_head_loss.1} parent=31 // pred_check
        %p212 = pneg %p142
      $region38: #{model_head_loss.1} parent=31 // pred_check_branch
        %214 = sbr.rel (%p212) target = $region40
      $region39: #{model_head_loss.1} parent=31 // pred_region
        %p215 = scmp.lt.s32.totalorder %s12, 1
        %s216 = scalar_select %p215, %s12, 1
        %s217 = smul.addr %s216, 8
        %s218 = scalar_lea.vmem %s5, %s217
      $region40: #{model_head_loss.1} parent=31 // pred_fallthru
        _
    $region32: #{model_head_loss.1} parent=5 // pred_fallthru
      _
    %p219 = scmp.le.s32.totalorder 1, %s12
    %p220 = scmp.lt.s32.totalorder %s12, 3
    %p221 = pnand %p219, %p220
    %p222 = pneg %p221
    // Predicated region
    $region41: #{model_head_loss.1} parent=5 // pred_check
      _
    $region42: #{model_head_loss.1} parent=5 // pred_check_branch
      %224 = sbr.rel (%p221) target = $region44
    $region43: #{model_head_loss.1} parent=5 // pred_region
      %s225 = ssub.s32 %s12, 1
      %p226 = scmp.lt.s32.totalorder %s17, 1
      %s227 = scalar_select %p226, %s17, 1
      %s228 = smul.addr %s227, 8
      %s229 = scalar_lea.vmem %s0, %s228
      %p230 = pneg %p38
      %p231 = pneg %p35
      %p232 = pneg %p59
      %p233 = pneg %p56
      %p234 = pneg %p80
      %p235 = pneg %p77
      %p236 = pneg %p101
      %p237 = pneg %p98
      %p238 = pneg %p122
      %p239 = pneg %p119
      %p240 = scmp.lt.s32.totalorder %s17, 1
      %s241 = scalar_select %p240, %s17, 1
      %s242 = smul.addr %s241, 8
      %s243 = scalar_lea.vmem %s5, %s242
      %p244 = pneg %p148
      %p245 = pneg %p145
      %p246 = pneg %p174
      %p247 = pneg %p171
      %p248 = scmp.lt.s32.totalorder %s17, 1
      %s249 = scalar_select %p248, %s17, 1
      %s250 = scalar_lea.vmem %s6, %s249
      %p251 = scmp.lt.s32.totalorder %s17, 1
      %s252 = scalar_select %p251, %s17, 1
      %s253 = smul.addr %s252, 8
      %s254 = scalar_lea.vmem %s0, %s253
      %p255 = scmp.lt.s32.totalorder %s17, 1
      %s256 = scalar_select %p255, %s17, 1
      %s257 = smul.addr %s256, 8
      %s258 = scalar_lea.vmem %s5, %s257
      %p259 = scmp.lt.s32.totalorder %s17, 1
      %s260 = scalar_select %p259, %s17, 1
      %s261 = scalar_lea.vmem %s6, %s260
      %v263 = vld [vmem:[%s254] sm:$0xff]
      %v264 = vpack.c.bf16 %v263, %v263
      %v265 = vld [vmem:[%s1] sm:$0xf]
      %v266 = vld [vmem:[%s1 + $0x4] sm:$0xf]
      %v267 = vld [vmem:[%s1 + $0x8] sm:$0xf]
      %v268 = vld [vmem:[%s1 + $0xc] sm:$0xf]
      %v269 = vld [vmem:[%s2] sm:$0x1]
      %v271 = vlaneseq
      %v272 = vshrl.u32 %v271, 7
      %v273 = vsub.s32 0, %v272
      %v274 = vrot.slane %v269, %v273
      %v280 = vunpack.c.l.b16 %v265
      %v281 = vunpack.c.l.b16 %v266
      %v282 = vunpack.c.l.b16 %v267
      %v283 = vunpack.c.l.b16 %v268
      %v284 = vpack.c.b16 %v281, %v280
      %v285 = vpack.c.b16 %v283, %v282
      %vm288 = vcmask 261120
      %v290 = vsel %vm288, %v264, 0
      %292 = vmatprep.subr.bf16.mxu0 0
      %293 = vmatpush1.bf16.msra.mxu0 0
      %294 = vmatprep.subr.bf16.mxu0 0
      %295 = vmatpush1.bf16.msra.mxu0 0
      %296 = vmatprep.subr.bf16.mxu0 0
      %297 = vmatpush1.bf16.msra.mxu0 0
      %298 = vmatprep.subr.bf16.mxu0 0
      %299 = vmatpush1.bf16.msra.mxu0 0
      %300 = vmatprep.subr.bf16.mxu0 0
      %301 = vmatpush1.bf16.msra.mxu0 0
      %302 = vmatprep.subr.bf16.mxu0 0
      %303 = vmatpush1.bf16.msra.mxu0 0
      %304 = vmatprep.subr.bf16.mxu0 0
      %305 = vmatpush1.bf16.msra.mxu0 %v285
      %306 = vmatprep.subr.bf16.mxu0 0
      %307 = vmatpush1.bf16.msra.mxu0 %v284
      %308 = vmatprep.subr.bf16.mxu0 0
      %309 = vmatpush2.bf16.msra.mxu0 0
      %310 = vmatprep.subr.bf16.mxu0 0
      %311 = vmatpush2.bf16.msra.mxu0 0
      %312 = vmatprep.subr.bf16.mxu0 0
      %313 = vmatpush2.bf16.msra.mxu0 0
      %314 = vmatprep.subr.bf16.mxu0 0
      %315 = vmatpush2.bf16.msra.mxu0 0
      %316 = vmatprep.subr.bf16.mxu0 0
      %317 = vmatpush2.bf16.msra.mxu0 0
      %318 = vmatprep.subr.bf16.mxu0 0
      %319 = vmatpush2.bf16.msra.mxu0 0
      %320 = vmatprep.subr.bf16.mxu0 0
      %321 = vmatpush2.bf16.msra.mxu0 0
      %322 = vmatprep.subr.bf16.mxu0 0
      %323 = vmatpush2.bf16.msra.mxu0 0
      %324 = vmatprep.mubr.bf16.mxu0 0
      %325 = vmatmul.mubr.bf16.gmra.mxu0 %v290
      %v326 = vpop.f32.mrf.mxu0
      %v327 = vadd.f32 %v274, %v326
      %v328 = vpop.f32.mrf.mxu0
      %v329 = vpop.f32.mrf.mxu0
      %v330 = vpop.f32.mrf.mxu0
      %331 = vdwg.mxu0
      %v332 = vtanh.pop %v327
      %v333 = vpack.c.bf16 %v332, %v332
      %v334 = vld [vmem:[%s3] sm:$0xf]
      %v335 = vld [vmem:[%s3 + $0x4] sm:$0xf]
      %v336 = vld [vmem:[%s3 + $0x8] sm:$0xf]
      %v337 = vld [vmem:[%s3 + $0xc] sm:$0xf]
      %v338 = vld [vmem:[%s4] sm:$0x1]
      %v340 = vlaneseq
      %v341 = vshrl.u32 %v340, 7
      %v342 = vsub.s32 0, %v341
      %v343 = vrot.slane %v338, %v342
      %v349 = vunpack.c.l.b16 %v334
      %v350 = vunpack.c.l.b16 %v335
      %v351 = vunpack.c.l.b16 %v336
      %v352 = vunpack.c.l.b16 %v337
      %v353 = vpack.c.b16 %v350, %v349
      %v354 = vpack.c.b16 %v352, %v351
      %v358 = vsel %vm288, %v333, 0
      %360 = vmatprep.subr.bf16.mxu0 0
      %361 = vmatpush1.bf16.msra.mxu0 0
      %362 = vmatprep.subr.bf16.mxu0 0
      %363 = vmatpush1.bf16.msra.mxu0 0
      %364 = vmatprep.subr.bf16.mxu0 0
      %365 = vmatpush1.bf16.msra.mxu0 0
      %366 = vmatprep.subr.bf16.mxu0 0
      %367 = vmatpush1.bf16.msra.mxu0 0
      %368 = vmatprep.subr.bf16.mxu0 0
      %369 = vmatpush1.bf16.msra.mxu0 0
      %370 = vmatprep.subr.bf16.mxu0 0
      %371 = vmatpush1.bf16.msra.mxu0 0
      %372 = vmatprep.subr.bf16.mxu0 0
      %373 = vmatpush1.bf16.msra.mxu0 %v354
      %374 = vmatprep.subr.bf16.mxu0 0
      %375 = vmatpush1.bf16.msra.mxu0 %v353
      %376 = vmatprep.subr.bf16.mxu0 0
      %377 = vmatpush2.bf16.msra.mxu0 0
      %378 = vmatprep.subr.bf16.mxu0 0
      %379 = vmatpush2.bf16.msra.mxu0 0
      %380 = vmatprep.subr.bf16.mxu0 0
      %381 = vmatpush2.bf16.msra.mxu0 0
      %382 = vmatprep.subr.bf16.mxu0 0
      %383 = vmatpush2.bf16.msra.mxu0 0
      %384 = vmatprep.subr.bf16.mxu0 0
      %385 = vmatpush2.bf16.msra.mxu0 0
      %386 = vmatprep.subr.bf16.mxu0 0
      %387 = vmatpush2.bf16.msra.mxu0 0
      %388 = vmatprep.subr.bf16.mxu0 0
      %389 = vmatpush2.bf16.msra.mxu0 0
      %390 = vmatprep.subr.bf16.mxu0 0
      %391 = vmatpush2.bf16.msra.mxu0 0
      %392 = vmatprep.mubr.bf16.mxu0 0
      %393 = vmatmul.mubr.bf16.gmra.mxu0 %v358
      %v394 = vpop.f32.mrf.mxu0
      %v395 = vadd.f32 %v343, %v394
      %v396 = vpop.f32.mrf.mxu0
      %v397 = vpop.f32.mrf.mxu0
      %v398 = vpop.f32.mrf.mxu0
      %399 = vdwg.mxu0
      %400 = vmax.xlane.f32.xlu0 %v395
      %v401 = vpop.xlane.xlu0 %400
      %v402 = vsub.f32 %v395, %v401
      %v403 = vmul.f32 %v402, 1.442695
      %v404 = vpow.pop %v403
      %405 = vadd.xlane.f32.xlu0 %v404
      %v406 = vpop.xlane.xlu0 %405
      %v407 = vlog2.pop %v406
      %v408 = vmul.f32 %v407, 0.6931472
      %v409 = vadd.f32 %v408, %v401
      %v410 = vld [vmem:[%s258] sm:$0xff]
      %v411 = vlaneseq
      %v412 = vand.u32 %v411, 127
      %413 = vset.pattern.permute.xlu0 0
      %414 = vperm.xlu0 %413, %v410
      %v415 = vpop.permute.xlu0 %414
      %vm416 = vcmp.eq.s32.totalorder %v412, %v415
      %v417 = vsel %vm416, %v395, 0.0
      %418 = vadd.xlane.f32.xlu0 %v417
      %v419 = vpop.xlane.xlu0 %418
      %v420 = vlaneseq
      %v421 = vshrl.u32 %v420, 7
      %s422 = smul.u32 %s17, 8
      %v423 = vstv %s422
      %v424 = vadd.s32 %v421, %v423
      %vm425 = vcmp.lt.s32.totalorder %v424, 16
      %vm426 = vcmp.ne.s32.totalorder %v410, 4294967196
      %vm427 = vmand %vm425, %vm426
      %v428 = vsub.f32 %v409, %v419
      %v429 = vsel %vm427, %v428, 0.0
      %vm430 = vcmask 7168
      %v431 = vsel %vm430, %v429, 0.0
      %432 = vadd.xlane.f32.xlu0 %v431
      %v433 = vpop.xlane.xlu0 %432
      %v434 = vrot.slane %v433, 4
      %v435 = vadd.f32 %v433, %v434
      %v436 = vrot.slane %v435, 2
      %v437 = vadd.f32 %v435, %v436
      %v438 = vrot.slane %v437, 1
      %v439 = vadd.f32 %v437, %v438
      %s440 = vtos %v439
      %v441 = vsel %vm427, 1, 0
      %v442 = vcvt.s32.f32 %v441
      %v443 = vsel %vm430, %v442, 0.0
      %444 = vadd.xlane.f32.xlu0 %v443
      %v445 = vpop.xlane.xlu0 %444
      %v446 = vrot.slane %v445, 4
      %v447 = vadd.f32 %v445, %v446
      %v448 = vrot.slane %v447, 2
      %v449 = vadd.f32 %v447, %v448
      %v450 = vrot.slane %v449, 1
      %v451 = vadd.f32 %v449, %v450
      %s452 = vtos %v451
      %vm453 = vcmp.eq.s32.totalorder %v412, 0
      %v454 = vstv %s440
      %v455 = vsel %vm453, %v454, 0.0
      %vm456 = vcmp.eq.s32.totalorder %v412, 1
      %v457 = vstv %s452
      %v458 = vsel %vm456, %v457, 0.0
      %v459 = vadd.f32 %v455, %v458
      %460 = vst [vmem:[%s261] sm:$0x1] %v459
      %p461 = scmp.lt.s32.totalorder %s17, 1
      %s462 = scalar_select %p461, %s17, 1
      %s463 = scalar_lea.vmem %s6, %s462
      // Predicated region
      $region45: #{model_head_loss.1} parent=43 // pred_check
        %p464 = pneg %p171
      $region46: #{model_head_loss.1} parent=43 // pred_check_branch
        %466 = sbr.rel (%p464) target = $region48
      $region47: #{model_head_loss.1} parent=43 // pred_region
        _
      $region48: #{model_head_loss.1} parent=43 // pred_fallthru
        _
    $region44: #{model_head_loss.1} parent=5 // pred_fallthru
      _
    %p467 = scmp.le.s32.totalorder 2, %s12
    // Predicated region
    $region49: #{model_head_loss.1} parent=5 // pred_check
      %p468 = pneg %p467
    $region50: #{model_head_loss.1} parent=5 // pred_check_branch
      %470 = sbr.rel (%p468) target = $region52
    $region51: #{model_head_loss.1} parent=5 // pred_region
      %s471 = ssub.s32 %s12, 2
      // Predicated region
      $region53: #{model_head_loss.1} parent=51 // pred_check
        %p472 = pneg %p177
      $region54: #{model_head_loss.1} parent=51 // pred_check_branch
        %474 = sbr.rel (%p472) target = $region56
      $region55: #{model_head_loss.1} parent=51 // pred_region
        %p475 = scmp.lt.s32.totalorder %s18, 1
        %s476 = scalar_select %p475, %s18, 1
        %s477 = scalar_lea.vmem %s6, %s476
      $region56: #{model_head_loss.1} parent=51 // pred_fallthru
        _
    $region52: #{model_head_loss.1} parent=5 // pred_fallthru
      _
  $region6: #{model_head_loss.1} parent=0 // loop_footer
    %s16 = sadd.s32 1, %s12
  $region7: #{model_head_loss.1} parent=0 // loop_footer_branch
    %11 = sbr.rel target = $region3
  $region8: #{model_head_loss.1} parent=0 // loop_exit
    _

</llo_original>
